<compile_context>
chip_gen: v7x
topology: tpu7x:2x2x1
jax: 0.10.0
libtpu: 0.0.40
codegen_flags: <defaults>
</compile_context>

<pallas_src>
import functools

import jax
import jax.numpy as jnp
import numpy as np
from jax.experimental import pallas as pl
from jax.experimental.pallas import tpu as pltpu


def _shift_lanes(a, m):
    """out[:, i] = a[:, i + m] if 0 <= i + m < a.shape[1] else 0  (m is static)."""
    if m == 0:
        return a
    n = a.shape[1]
    zeros = jnp.zeros((a.shape[0], abs(m)), a.dtype)
    if m > 0:
        return jnp.concatenate([a[:, m:], zeros], axis=1)
    return jnp.concatenate([zeros, a[:, : n + m]], axis=1)


def _fire_kernel(x_ref, wsq_ref, bsq_ref, wex_ref, bex_ref, mask_ref, o_ref, *, W):
    # x_ref:   (1, Cin, HW)       input, channels in sublanes, spatial in lanes
    # wsq_ref: (Csq, Cin)         squeeze 1x1 weights
    # bsq_ref: (Csq, 1)           squeeze bias
    # wex_ref: (Ce1+Ce3, 9*Csq)   combined expand weights (e1 rows: centre tap only)
    # bex_ref: (Ce1+Ce3, 1)       combined expand bias
    # mask_ref:(9, HW)            border-validity mask per 3x3 tap
    # o_ref:   (1, Ce1+Ce3, HW)
    x = x_ref[0]

    # --- squeeze 1x1 conv + bias + ReLU (stays in VMEM, never hits HBM) ---
    s = jnp.dot(wsq_ref[...], x, preferred_element_type=jnp.float32) + bsq_ref[...]
    s = jnp.maximum(s, 0.0)

    # --- in-VMEM im2col: 9 zero-filled shifted copies of s, border-masked ---
    masks = mask_ref[...]
    taps = []
    for dy in range(3):
        for dx in range(3):
            t = dy * 3 + dx
            m = (dy - 1) * W + (dx - 1)
            taps.append(_shift_lanes(s, m) * masks[t:t + 1, :])
    p = jnp.concatenate(taps, axis=0)                      # (9*Csq, HW)

    # --- single combined expand matmul (expand1x1 + expand3x3) + bias + ReLU ---
    y = jnp.dot(wex_ref[...], p, preferred_element_type=jnp.float32) + bex_ref[...]
    o_ref[0] = jnp.maximum(y, 0.0).astype(o_ref.dtype)


def fire_forward(x_nchw, params):
    """Fire forward. x_nchw: (B, Cin, H, W) float32. Returns (B, Ce1+Ce3, H, W)."""
    w_sq, b_sq, w_e1, b_e1, w_e3, b_e3 = params   # PyTorch-layout weights (OIHW)
    B, Cin, H, W = x_nchw.shape
    HW = H * W
    Csq = w_sq.shape[0]
    Ce1 = w_e1.shape[0]
    Ce3 = w_e3.shape[0]
    Ce = Ce1 + Ce3
    f32 = jnp.float32
    # TODO(synk): optionally cast activations/weights to bfloat16 here (keeping
    # f32 MXU accumulation) to halve HBM traffic; kept f32 for exact parity
    # with the f32 reference check.

    # Squeeze weights in (Csq, Cin) matmul layout (OIHW 1x1 -> plain reshape).
    wsq_m = w_sq.reshape(Csq, Cin).astype(f32)
    bsq_m = b_sq.reshape(Csq, 1).astype(f32)

    # Combined expand weight (Ce1+Ce3, 9*Csq); columns ordered (dy, dx, ci) to
    # match the tap stacking inside the kernel.
    we3_m = jnp.transpose(w_e3, (0, 2, 3, 1)).reshape(Ce3, 9 * Csq).astype(f32)
    we1_m = (
        jnp.zeros((Ce1, 9, Csq), f32)
        .at[:, 4, :]                                  # centre tap (dy=1, dx=1)
        .set(w_e1.reshape(Ce1, Csq).astype(f32))
        .reshape(Ce1, 9 * Csq)
    )
    wex_m = jnp.concatenate([we1_m, we3_m], axis=0)          # (Ce, 9*Csq)
    bex_m = jnp.concatenate([b_e1, b_e3]).reshape(Ce, 1).astype(f32)

    # Per-tap border masks (static, tiny, computed once at trace time).
    rows = np.arange(HW) // W
    cols = np.arange(HW) % W
    masks_np = np.zeros((9, HW), np.float32)
    for dy in range(3):
        for dx in range(3):
            oy, ox = dy - 1, dx - 1
            valid = ((rows + oy >= 0) & (rows + oy < H) &
                     (cols + ox >= 0) & (cols + ox < W))
            masks_np[dy * 3 + dx] = valid.astype(np.float32)
    masks = jnp.asarray(masks_np)

    # NCHW -> (B, Cin, HW): no transpose, spatial stays in the lane dimension.
    x_flat = x_nchw.reshape(B, Cin, HW).astype(f32)

    kernel = functools.partial(_fire_kernel, W=W)
    out = pl.pallas_call(
        kernel,
        out_shape=jax.ShapeDtypeStruct((B, Ce, HW), f32),
        grid=(B,),
        in_specs=[
            pl.BlockSpec((1, Cin, HW), lambda b: (b, 0, 0)),
            pl.BlockSpec((Csq, Cin), lambda b: (0, 0)),
            pl.BlockSpec((Csq, 1), lambda b: (0, 0)),
            pl.BlockSpec((Ce, 9 * Csq), lambda b: (0, 0)),
            pl.BlockSpec((Ce, 1), lambda b: (0, 0)),
            pl.BlockSpec((9, HW), lambda b: (0, 0)),
        ],
        out_specs=pl.BlockSpec((1, Ce, HW), lambda b: (b, 0, 0)),
        compiler_params=pltpu.CompilerParams(
            dimension_semantics=("parallel",)),
    )(x_flat, wsq_m, bsq_m, wex_m, bex_m, masks)

    return out.reshape(B, Ce, H, W)


def fire_reference(x_nchw, params):
    """Pure-JAX reference matching the PyTorch Fire forward (NCHW)."""
    w_sq, b_sq, w_e1, b_e1, w_e3, b_e3 = params

    def conv(x, w, b, pad):
        y = jax.lax.conv_general_dilated(
            x, w, window_strides=(1, 1), padding=[(pad, pad), (pad, pad)],
            dimension_numbers=("NCHW", "OIHW", "NCHW"))
        return y + b.reshape(1, -1, 1, 1)

    s = jnp.maximum(conv(x_nchw, w_sq, b_sq, 0), 0.0)
    e1 = jnp.maximum(conv(s, w_e1, b_e1, 0), 0.0)
    e3 = jnp.maximum(conv(s, w_e3, b_e3, 1), 0.0)
    return jnp.concatenate([e1, e3], axis=1)


if __name__ == "__main__":
    # Fire(inplanes=4, squeeze_planes=8, expand1x1_planes=16, expand3x3_planes=16)
    B, Cin, H, W = 2, 4, 16, 16
    Csq, Ce1, Ce3 = 8, 16, 16

    key = jax.random.PRNGKey(0)
    ks = jax.random.split(key, 7)
    x = jax.random.normal(ks[0], (B, Cin, H, W), dtype=jnp.float32)

    params = (
        0.1 * jax.random.normal(ks[1], (Csq, Cin, 1, 1), dtype=jnp.float32),   # squeeze.weight
        0.1 * jax.random.normal(ks[2], (Csq,), dtype=jnp.float32),             # squeeze.bias
        0.1 * jax.random.normal(ks[3], (Ce1, Csq, 1, 1), dtype=jnp.float32),   # expand1x1.weight
        0.1 * jax.random.normal(ks[4], (Ce1,), dtype=jnp.float32),             # expand1x1.bias
        0.1 * jax.random.normal(ks[5], (Ce3, Csq, 3, 3), dtype=jnp.float32),   # expand3x3.weight
        0.1 * jax.random.normal(ks[6], (Ce3,), dtype=jnp.float32),             # expand3x3.bias
    )

    out = jax.block_until_ready(fire_forward(x, params))
    ref = jax.block_until_ready(fire_reference(x, params))

    assert out.shape == (B, Ce1 + Ce3, H, W), out.shape
    np.testing.assert_allclose(np.asarray(out), np.asarray(ref), rtol=1e-5, atol=1e-5)
    print("KERNEL_OK")
</pallas_src>

<mosaic_0001>
module attributes {stable_mosaic.version = 11 : i64} {
  func.func @_fire_kernel(%arg0: i32, %arg1: memref<1x4x256xf32, #tpu.memory_space<vmem>>, %arg2: memref<8x4xf32, #tpu.memory_space<vmem>>, %arg3: memref<8x1xf32, #tpu.memory_space<vmem>>, %arg4: memref<32x72xf32, #tpu.memory_space<vmem>>, %arg5: memref<32x1xf32, #tpu.memory_space<vmem>>, %arg6: memref<9x256xf32, #tpu.memory_space<vmem>>, %arg7: memref<1x32x256xf32, #tpu.memory_space<vmem>>) attributes {dimension_semantics = [#tpu.dimension_semantics<parallel>], iteration_bounds = array<i64: 2>, scalar_prefetch = 0 : i64, scratch_operands = 0 : i64, tpu.core_type = #tpu.core_type<tc>, window_params = [{transform_indices = @transform_0, window_bounds = array<i64: 1, 4, 256>}, {pipeline_mode = #tpu.pipeline_mode<synchronous>, transform_indices = @transform_1, window_bounds = array<i64: 8, 4>}, {pipeline_mode = #tpu.pipeline_mode<synchronous>, transform_indices = @transform_2, window_bounds = array<i64: 8, 1>}, {pipeline_mode = #tpu.pipeline_mode<synchronous>, transform_indices = @transform_3, window_bounds = array<i64: 32, 72>}, {pipeline_mode = #tpu.pipeline_mode<synchronous>, transform_indices = @transform_4, window_bounds = array<i64: 32, 1>}, {pipeline_mode = #tpu.pipeline_mode<synchronous>, transform_indices = @transform_5, window_bounds = array<i64: 9, 256>}, {transform_indices = @transform_6, window_bounds = array<i64: 1, 32, 256>}]} {
    %c0 = arith.constant 0 : index
    %c0_0 = arith.constant 0 : index
    %c0_1 = arith.constant 0 : index
    %0 = vector.load %arg1[%c0, %c0_0, %c0_1] : memref<1x4x256xf32, #tpu.memory_space<vmem>>, vector<1x4x256xf32>
    %1 = vector.shape_cast %0 : vector<1x4x256xf32> to vector<4x256xf32>
    %c0_2 = arith.constant 0 : index
    %c0_3 = arith.constant 0 : index
    %2 = vector.load %arg2[%c0_2, %c0_3] : memref<8x4xf32, #tpu.memory_space<vmem>>, vector<8x4xf32>
    %cst = arith.constant dense<0.000000e+00> : vector<8x256xf32>
    %3 = tpu.matmul %2, %1, %cst {dimension_numbers = #tpu.dot_dimension_numbers<[1], [0], [0], [1], [0, 0, 1, 1], [], []>} : vector<8x4xf32>, vector<4x256xf32>, vector<8x256xf32> -> vector<8x256xf32>
    %c0_4 = arith.constant 0 : index
    %c0_5 = arith.constant 0 : index
    %4 = vector.load %arg3[%c0_4, %c0_5] : memref<8x1xf32, #tpu.memory_space<vmem>>, vector<8x1xf32>
    %5 = vector.broadcast %4 : vector<8x1xf32> to vector<8x256xf32>
    %6 = arith.addf %3, %5 : vector<8x256xf32>
    %cst_6 = arith.constant 0.000000e+00 : f32
    %7 = vector.broadcast %cst_6 : f32 to vector<8x256xf32>
    %8 = arith.maximumf %6, %7 : vector<8x256xf32>
    %c0_7 = arith.constant 0 : index
    %c0_8 = arith.constant 0 : index
    %9 = vector.load %arg6[%c0_7, %c0_8] : memref<9x256xf32, #tpu.memory_space<vmem>>, vector<9x256xf32>
    %cst_9 = arith.constant 0.000000e+00 : f32
    %10 = vector.broadcast %cst_9 : f32 to vector<8x17xf32>
    %11 = vector.extract_strided_slice %8 {offsets = [0, 0], sizes = [8, 239], strides = [1, 1]} : vector<8x256xf32> to vector<8x239xf32>
    %12 = tpu.concatenate %10, %11 in 1 : vector<8x17xf32>, vector<8x239xf32> -> vector<8x256xf32>
    %13 = vector.extract_strided_slice %9 {offsets = [0, 0], sizes = [1, 256], strides = [1, 1]} : vector<9x256xf32> to vector<1x256xf32>
    %14 = vector.broadcast %13 : vector<1x256xf32> to vector<8x256xf32>
    %15 = arith.mulf %12, %14 : vector<8x256xf32>
    %cst_10 = arith.constant 0.000000e+00 : f32
    %16 = vector.broadcast %cst_10 : f32 to vector<8x16xf32>
    %17 = vector.extract_strided_slice %8 {offsets = [0, 0], sizes = [8, 240], strides = [1, 1]} : vector<8x256xf32> to vector<8x240xf32>
    %18 = tpu.concatenate %16, %17 in 1 : vector<8x16xf32>, vector<8x240xf32> -> vector<8x256xf32>
    %19 = vector.extract_strided_slice %9 {offsets = [1, 0], sizes = [1, 256], strides = [1, 1]} : vector<9x256xf32> to vector<1x256xf32>
    %20 = vector.broadcast %19 : vector<1x256xf32> to vector<8x256xf32>
    %21 = arith.mulf %18, %20 : vector<8x256xf32>
    %cst_11 = arith.constant 0.000000e+00 : f32
    %22 = vector.broadcast %cst_11 : f32 to vector<8x15xf32>
    %23 = vector.extract_strided_slice %8 {offsets = [0, 0], sizes = [8, 241], strides = [1, 1]} : vector<8x256xf32> to vector<8x241xf32>
    %24 = tpu.concatenate %22, %23 in 1 : vector<8x15xf32>, vector<8x241xf32> -> vector<8x256xf32>
    %25 = vector.extract_strided_slice %9 {offsets = [2, 0], sizes = [1, 256], strides = [1, 1]} : vector<9x256xf32> to vector<1x256xf32>
    %26 = vector.broadcast %25 : vector<1x256xf32> to vector<8x256xf32>
    %27 = arith.mulf %24, %26 : vector<8x256xf32>
    %cst_12 = arith.constant 0.000000e+00 : f32
    %28 = vector.broadcast %cst_12 : f32 to vector<8x1xf32>
    %29 = vector.extract_strided_slice %8 {offsets = [0, 0], sizes = [8, 255], strides = [1, 1]} : vector<8x256xf32> to vector<8x255xf32>
    %30 = tpu.concatenate %28, %29 in 1 : vector<8x1xf32>, vector<8x255xf32> -> vector<8x256xf32>
    %31 = vector.extract_strided_slice %9 {offsets = [3, 0], sizes = [1, 256], strides = [1, 1]} : vector<9x256xf32> to vector<1x256xf32>
    %32 = vector.broadcast %31 : vector<1x256xf32> to vector<8x256xf32>
    %33 = arith.mulf %30, %32 : vector<8x256xf32>
    %34 = vector.extract_strided_slice %9 {offsets = [4, 0], sizes = [1, 256], strides = [1, 1]} : vector<9x256xf32> to vector<1x256xf32>
    %35 = vector.broadcast %34 : vector<1x256xf32> to vector<8x256xf32>
    %36 = arith.mulf %8, %35 : vector<8x256xf32>
    %cst_13 = arith.constant 0.000000e+00 : f32
    %37 = vector.broadcast %cst_13 : f32 to vector<8x1xf32>
    %38 = vector.extract_strided_slice %8 {offsets = [0, 1], sizes = [8, 255], strides = [1, 1]} : vector<8x256xf32> to vector<8x255xf32>
    %39 = tpu.concatenate %38, %37 in 1 : vector<8x255xf32>, vector<8x1xf32> -> vector<8x256xf32>
    %40 = vector.extract_strided_slice %9 {offsets = [5, 0], sizes = [1, 256], strides = [1, 1]} : vector<9x256xf32> to vector<1x256xf32>
    %41 = vector.broadcast %40 : vector<1x256xf32> to vector<8x256xf32>
    %42 = arith.mulf %39, %41 : vector<8x256xf32>
    %cst_14 = arith.constant 0.000000e+00 : f32
    %43 = vector.broadcast %cst_14 : f32 to vector<8x15xf32>
    %44 = vector.extract_strided_slice %8 {offsets = [0, 15], sizes = [8, 241], strides = [1, 1]} : vector<8x256xf32> to vector<8x241xf32>
    %45 = tpu.concatenate %44, %43 in 1 : vector<8x241xf32>, vector<8x15xf32> -> vector<8x256xf32>
    %46 = vector.extract_strided_slice %9 {offsets = [6, 0], sizes = [1, 256], strides = [1, 1]} : vector<9x256xf32> to vector<1x256xf32>
    %47 = vector.broadcast %46 : vector<1x256xf32> to vector<8x256xf32>
    %48 = arith.mulf %45, %47 : vector<8x256xf32>
    %cst_15 = arith.constant 0.000000e+00 : f32
    %49 = vector.broadcast %cst_15 : f32 to vector<8x16xf32>
    %50 = vector.extract_strided_slice %8 {offsets = [0, 16], sizes = [8, 240], strides = [1, 1]} : vector<8x256xf32> to vector<8x240xf32>
    %51 = tpu.concatenate %50, %49 in 1 : vector<8x240xf32>, vector<8x16xf32> -> vector<8x256xf32>
    %52 = vector.extract_strided_slice %9 {offsets = [7, 0], sizes = [1, 256], strides = [1, 1]} : vector<9x256xf32> to vector<1x256xf32>
    %53 = vector.broadcast %52 : vector<1x256xf32> to vector<8x256xf32>
    %54 = arith.mulf %51, %53 : vector<8x256xf32>
    %cst_16 = arith.constant 0.000000e+00 : f32
    %55 = vector.broadcast %cst_16 : f32 to vector<8x17xf32>
    %56 = vector.extract_strided_slice %8 {offsets = [0, 17], sizes = [8, 239], strides = [1, 1]} : vector<8x256xf32> to vector<8x239xf32>
    %57 = tpu.concatenate %56, %55 in 1 : vector<8x239xf32>, vector<8x17xf32> -> vector<8x256xf32>
    %58 = vector.extract_strided_slice %9 {offsets = [8, 0], sizes = [1, 256], strides = [1, 1]} : vector<9x256xf32> to vector<1x256xf32>
    %59 = vector.broadcast %58 : vector<1x256xf32> to vector<8x256xf32>
    %60 = arith.mulf %57, %59 : vector<8x256xf32>
    %61 = tpu.concatenate %15, %21, %27, %33, %36, %42, %48, %54, %60 in 0 : vector<8x256xf32>, vector<8x256xf32>, vector<8x256xf32>, vector<8x256xf32>, vector<8x256xf32>, vector<8x256xf32>, vector<8x256xf32>, vector<8x256xf32>, vector<8x256xf32> -> vector<72x256xf32>
    %c0_17 = arith.constant 0 : index
    %c0_18 = arith.constant 0 : index
    %62 = vector.load %arg4[%c0_17, %c0_18] : memref<32x72xf32, #tpu.memory_space<vmem>>, vector<32x72xf32>
    %cst_19 = arith.constant dense<0.000000e+00> : vector<32x256xf32>
    %63 = tpu.matmul %62, %61, %cst_19 {dimension_numbers = #tpu.dot_dimension_numbers<[1], [0], [0], [1], [0, 0, 1, 1], [], []>} : vector<32x72xf32>, vector<72x256xf32>, vector<32x256xf32> -> vector<32x256xf32>
    %c0_20 = arith.constant 0 : index
    %c0_21 = arith.constant 0 : index
    %64 = vector.load %arg5[%c0_20, %c0_21] : memref<32x1xf32, #tpu.memory_space<vmem>>, vector<32x1xf32>
    %65 = vector.broadcast %64 : vector<32x1xf32> to vector<32x256xf32>
    %66 = arith.addf %63, %65 : vector<32x256xf32>
    %cst_22 = arith.constant 0.000000e+00 : f32
    %67 = vector.broadcast %cst_22 : f32 to vector<32x256xf32>
    %68 = arith.maximumf %66, %67 : vector<32x256xf32>
    %c0_23 = arith.constant 0 : index
    %c0_24 = arith.constant 0 : index
    %c0_25 = arith.constant 0 : index
    %69 = vector.load %arg7[%c0_23, %c0_24, %c0_25] : memref<1x32x256xf32, #tpu.memory_space<vmem>>, vector<1x32x256xf32>
    %70 = vector.shape_cast %69 : vector<1x32x256xf32> to vector<32x256xf32>
    %71 = vector.shape_cast %68 : vector<32x256xf32> to vector<1x32x256xf32>
    tpu.vector_store %arg7[%c0_23, %c0_24, %c0_25], %71 {strides = array<i32>} : memref<1x32x256xf32, #tpu.memory_space<vmem>>, vector<1x32x256xf32>,
    return
  }
  func.func @transform_0(%arg0: i32) -> (i32, i32, i32) {
    %c0_i32 = arith.constant 0 : i32
    %c0_i32_0 = arith.constant 0 : i32
    %c0_i32_1 = arith.constant 0 : i32
    return %arg0, %c0_i32, %c0_i32_0 : i32, i32, i32
  }
  func.func @transform_1(%arg0: i32) -> (i32, i32) {
    %c0_i32 = arith.constant 0 : i32
    %c0_i32_0 = arith.constant 0 : i32
    %c0_i32_1 = arith.constant 0 : i32
    return %c0_i32, %c0_i32_0 : i32, i32
  }
  func.func @transform_2(%arg0: i32) -> (i32, i32) {
    %c0_i32 = arith.constant 0 : i32
    %c0_i32_0 = arith.constant 0 : i32
    %c0_i32_1 = arith.constant 0 : i32
    return %c0_i32, %c0_i32_0 : i32, i32
  }
  func.func @transform_3(%arg0: i32) -> (i32, i32) {
    %c0_i32 = arith.constant 0 : i32
    %c0_i32_0 = arith.constant 0 : i32
    %c0_i32_1 = arith.constant 0 : i32
    return %c0_i32, %c0_i32_0 : i32, i32
  }
  func.func @transform_4(%arg0: i32) -> (i32, i32) {
    %c0_i32 = arith.constant 0 : i32
    %c0_i32_0 = arith.constant 0 : i32
    %c0_i32_1 = arith.constant 0 : i32
    return %c0_i32, %c0_i32_0 : i32, i32
  }
  func.func @transform_5(%arg0: i32) -> (i32, i32) {
    %c0_i32 = arith.constant 0 : i32
    %c0_i32_0 = arith.constant 0 : i32
    %c0_i32_1 = arith.constant 0 : i32
    return %c0_i32, %c0_i32_0 : i32, i32
  }
  func.func @transform_6(%arg0: i32) -> (i32, i32, i32) {
    %c0_i32 = arith.constant 0 : i32
    %c0_i32_0 = arith.constant 0 : i32
    %c0_i32_1 = arith.constant 0 : i32
    return %arg0, %c0_i32, %c0_i32_0 : i32, i32, i32
  }
}

</mosaic_0001>

<llo_original>
// kernel: tpu_custom_call.1
$region0: #{tpu_custom_call.1}
  #allocation0 [shape = 'u32[]', space=smem, size = 0x4, offset = 0x4, fixed_abs, tag = 'smem constant byte address 0x4 - core index']
  #allocation1 [shape = 'u32[144,128]{1,0:T(1,128)}', space=vmem, size = 0x12000, scoped, tag = 'internal scratch']
  %s0 = inlined_call_operand.hbm [shape: f32[2,4,256], index: 0, kind: input, shape index: {}]
  %s1 = inlined_call_operand.vmem [shape: f32[8,4], index: 1, kind: input, shape index: {}]
  %s2 = inlined_call_operand.vmem [shape: f32[8,1], index: 2, kind: input, shape index: {}]
  %s3 = inlined_call_operand.vmem [shape: f32[32,72], index: 3, kind: input, shape index: {}]
  %s4 = inlined_call_operand.vmem [shape: f32[32,1], index: 4, kind: input, shape index: {}]
  %s5 = inlined_call_operand.vmem [shape: f32[9,256], index: 5, kind: input, shape index: {}]
  %s6 = inlined_call_operand.hbm [shape: f32[2,32,256], index: 6, kind: output, shape index: {}]
  %s7 = sld [smem:[#allocation0]]
  $region61: #{tpu_custom_call.1} parent=0
    _
  %s9 = ssub.s32 1, %s7
  %s10 = scalar_select 0, %s9, %s7
  $region1: #{tpu_custom_call.1} parent=0
    #allocation2 [shape = 'u8[8192]{0}', space=vmem, size = 0x2000, scoped, tag = 'input window, operand 0']
    #allocation3 [shape = 's32[2]{0}', space=sflag, size = 0x8, scoped, tag = 'scoped memory for tpu_custom_call.1']
    #allocation4 [shape = 's32[2]{0}', space=sflag, size = 0x8, scoped, tag = 'scoped memory for tpu_custom_call.1']
    #allocation5 [shape = 'u8[65536]{0}', space=vmem, size = 0x10000, scoped, tag = 'output window, operand 0']
    %11 = vsyncpa [#allocation3], 0
    %s12 = scalar_lea.sflag [#allocation3], 1
    %13 = vsyncpa %s12, 0
    %14 = vsyncpa [#allocation4], 0
    %s15 = scalar_lea.sflag [#allocation4], 1
    %16 = vsyncpa %s15, 0
    loop: start=0, step=1, limit=4
    $region2: #{tpu_custom_call.1} parent=1 // loop_pre_header
      _
    $region3: #{tpu_custom_call.1} parent=1 // loop_header
      %s18 = sphi 0, %s22
      %p19 = scmp.ge.s32.totalorder %s18, 4
      %s28 = sphi 0, %s30
      %s31 = sphi 0, %s28
      %s32 = sphi 0, %s31
      %s48 = sphi 0, %s32
      %s52 = sphi 0, %s52
      %s54 = sphi 0, %s52
      %s55 = sphi 0, %s54
      %s69 = sphi 0, %s55
      %s73 = sphi 0, %s73
      %s75 = sphi 0, %s73
      %s76 = sphi 0, %s75
      %s90 = sphi 0, %s76
      %s94 = sphi 0, %s94
      %s96 = sphi 0, %s94
      %s97 = sphi 0, %s96
      %s111 = sphi 0, %s97
      %s115 = sphi 0, %s115
      %s117 = sphi 0, %s115
      %s118 = sphi 0, %s117
      %s132 = sphi 0, %s118
      %s136 = sphi 0, %s136
      %s138 = sphi 0, %s136
      %s139 = sphi 0, %s138
      %s153 = sphi 0, %s139
      %s159 = sphi 0, %s161
      %s162 = sphi 0, %s159
      %s163 = sphi 0, %s162
      %s179 = sphi 0, %s163
    $region4: #{tpu_custom_call.1} parent=1 // loop_header_branch
      %21 = sbr.rel (%p19) target = $region8
    $region5: #{tpu_custom_call.1} parent=1 // loop_body
      %s23 = ssub.s32 %s18, 1
      %s24 = ssub.s32 %s18, 2
      %s25 = sadd.s32 %s18, 1
      %s26 = ssub.s32 %s18, %s25
      %p27 = scmp.eq.s32.totalorder %s26, 0
      %s29 = sadd.s32 %s28, 1
      %s30 = scalar_select %p27, %s28, %s29
      %p33 = pneg %p27
      %p34 = scmp.eq.s32.totalorder %s18, 1
      %p35 = por %p33, %p34
      %p36 = scmp.ne.s32.totalorder %s28, %s31
      %p37 = scmp.eq.s32.totalorder %s18, 0
      %p38 = por %p36, %p37
      %p39 = scmp.ne.s32.totalorder %s28, %s31
      %p40 = scmp.eq.s32.totalorder %s23, 1
      %p41 = por %p39, %p40
      %p42 = scmp.ne.s32.totalorder %s31, %s32
      %p43 = scmp.eq.s32.totalorder %s23, 0
      %p44 = por %p42, %p43
      %p45 = scmp.ne.s32.totalorder %s31, %s32
      %p46 = scmp.eq.s32.totalorder %s24, 1
      %p47 = por %p45, %p46
      %p49 = scmp.ne.s32.totalorder %s32, %s48
      %p50 = scmp.eq.s32.totalorder %s24, 0
      %p51 = por %p49, %p50
      %s53 = sadd.s32 %s52, 1
      %p56 = scmp.eq.s32.totalorder %s18, 1
      %p57 = scmp.ne.s32.totalorder %s52, %s54
      %p58 = scmp.eq.s32.totalorder %s18, 0
      %p59 = por %p57, %p58
      %p60 = scmp.ne.s32.totalorder %s52, %s54
      %p61 = scmp.eq.s32.totalorder %s23, 1
      %p62 = por %p60, %p61
      %p63 = scmp.ne.s32.totalorder %s54, %s55
      %p64 = scmp.eq.s32.totalorder %s23, 0
      %p65 = por %p63, %p64
      %p66 = scmp.ne.s32.totalorder %s54, %s55
      %p67 = scmp.eq.s32.totalorder %s24, 1
      %p68 = por %p66, %p67
      %p70 = scmp.ne.s32.totalorder %s55, %s69
      %p71 = scmp.eq.s32.totalorder %s24, 0
      %p72 = por %p70, %p71
      %s74 = sadd.s32 %s73, 1
      %p77 = scmp.eq.s32.totalorder %s18, 1
      %p78 = scmp.ne.s32.totalorder %s73, %s75
      %p79 = scmp.eq.s32.totalorder %s18, 0
      %p80 = por %p78, %p79
      %p81 = scmp.ne.s32.totalorder %s73, %s75
      %p82 = scmp.eq.s32.totalorder %s23, 1
      %p83 = por %p81, %p82
      %p84 = scmp.ne.s32.totalorder %s75, %s76
      %p85 = scmp.eq.s32.totalorder %s23, 0
      %p86 = por %p84, %p85
      %p87 = scmp.ne.s32.totalorder %s75, %s76
      %p88 = scmp.eq.s32.totalorder %s24, 1
      %p89 = por %p87, %p88
      %p91 = scmp.ne.s32.totalorder %s76, %s90
      %p92 = scmp.eq.s32.totalorder %s24, 0
      %p93 = por %p91, %p92
      %s95 = sadd.s32 %s94, 1
      %p98 = scmp.eq.s32.totalorder %s18, 1
      %p99 = scmp.ne.s32.totalorder %s94, %s96
      %p100 = scmp.eq.s32.totalorder %s18, 0
      %p101 = por %p99, %p100
      %p102 = scmp.ne.s32.totalorder %s94, %s96
      %p103 = scmp.eq.s32.totalorder %s23, 1
      %p104 = por %p102, %p103
      %p105 = scmp.ne.s32.totalorder %s96, %s97
      %p106 = scmp.eq.s32.totalorder %s23, 0
      %p107 = por %p105, %p106
      %p108 = scmp.ne.s32.totalorder %s96, %s97
      %p109 = scmp.eq.s32.totalorder %s24, 1
      %p110 = por %p108, %p109
      %p112 = scmp.ne.s32.totalorder %s97, %s111
      %p113 = scmp.eq.s32.totalorder %s24, 0
      %p114 = por %p112, %p113
      %s116 = sadd.s32 %s115, 1
      %p119 = scmp.eq.s32.totalorder %s18, 1
      %p120 = scmp.ne.s32.totalorder %s115, %s117
      %p121 = scmp.eq.s32.totalorder %s18, 0
      %p122 = por %p120, %p121
      %p123 = scmp.ne.s32.totalorder %s115, %s117
      %p124 = scmp.eq.s32.totalorder %s23, 1
      %p125 = por %p123, %p124
      %p126 = scmp.ne.s32.totalorder %s117, %s118
      %p127 = scmp.eq.s32.totalorder %s23, 0
      %p128 = por %p126, %p127
      %p129 = scmp.ne.s32.totalorder %s117, %s118
      %p130 = scmp.eq.s32.totalorder %s24, 1
      %p131 = por %p129, %p130
      %p133 = scmp.ne.s32.totalorder %s118, %s132
      %p134 = scmp.eq.s32.totalorder %s24, 0
      %p135 = por %p133, %p134
      %s137 = sadd.s32 %s136, 1
      %p140 = scmp.eq.s32.totalorder %s18, 1
      %p141 = scmp.ne.s32.totalorder %s136, %s138
      %p142 = scmp.eq.s32.totalorder %s18, 0
      %p143 = por %p141, %p142
      %p144 = scmp.ne.s32.totalorder %s136, %s138
      %p145 = scmp.eq.s32.totalorder %s23, 1
      %p146 = por %p144, %p145
      %p147 = scmp.ne.s32.totalorder %s138, %s139
      %p148 = scmp.eq.s32.totalorder %s23, 0
      %p149 = por %p147, %p148
      %p150 = scmp.ne.s32.totalorder %s138, %s139
      %p151 = scmp.eq.s32.totalorder %s24, 1
      %p152 = por %p150, %p151
      %p154 = scmp.ne.s32.totalorder %s139, %s153
      %p155 = scmp.eq.s32.totalorder %s24, 0
      %p156 = por %p154, %p155
      %s157 = ssub.s32 %s18, %s25
      %p158 = scmp.eq.s32.totalorder %s157, 0
      %s160 = sadd.s32 %s159, 1
      %s161 = scalar_select %p158, %s159, %s160
      %p164 = pneg %p158
      %p165 = scmp.eq.s32.totalorder %s18, 1
      %p166 = por %p164, %p165
      %p167 = scmp.ne.s32.totalorder %s159, %s162
      %p168 = scmp.eq.s32.totalorder %s18, 0
      %p169 = por %p167, %p168
      %p170 = scmp.ne.s32.totalorder %s159, %s162
      %p171 = scmp.eq.s32.totalorder %s23, 1
      %p172 = por %p170, %p171
      %p173 = scmp.ne.s32.totalorder %s162, %s163
      %p174 = scmp.eq.s32.totalorder %s23, 0
      %p175 = por %p173, %p174
      %p176 = scmp.ne.s32.totalorder %s162, %s163
      %p177 = scmp.eq.s32.totalorder %s24, 1
      %p178 = por %p176, %p177
      %p180 = scmp.ne.s32.totalorder %s163, %s179
      %p181 = scmp.eq.s32.totalorder %s24, 0
      %p182 = por %p180, %p181
      %p183 = scmp.le.s32.totalorder 1, %s18
      %p184 = scmp.lt.s32.totalorder %s18, 3
      %p185 = pnand %p183, %p184
      %p186 = pneg %p185
      // Predicated region
      $region9: #{tpu_custom_call.1} parent=5 // pred_check
        _
      $region10: #{tpu_custom_call.1} parent=5 // pred_check_branch
        %188 = sbr.rel (%p185) target = $region12
      $region11: #{tpu_custom_call.1} parent=5 // pred_region
        %s189 = ssub.s32 %s18, 1
        // Predicated region
        $region13: #{tpu_custom_call.1} parent=11 // pred_check
          %p190 = pneg %p65
        $region14: #{tpu_custom_call.1} parent=11 // pred_check_branch
          %192 = sbr.rel (%p190) target = $region16
        $region15: #{tpu_custom_call.1} parent=11 // pred_region
          _
        $region16: #{tpu_custom_call.1} parent=11 // pred_fallthru
          _
        // Predicated region
        $region17: #{tpu_custom_call.1} parent=11 // pred_check
          %p193 = pneg %p86
        $region18: #{tpu_custom_call.1} parent=11 // pred_check_branch
          %195 = sbr.rel (%p193) target = $region20
        $region19: #{tpu_custom_call.1} parent=11 // pred_region
          _
        $region20: #{tpu_custom_call.1} parent=11 // pred_fallthru
          _
        // Predicated region
        $region21: #{tpu_custom_call.1} parent=11 // pred_check
          %p196 = pneg %p107
        $region22: #{tpu_custom_call.1} parent=11 // pred_check_branch
          %198 = sbr.rel (%p196) target = $region24
        $region23: #{tpu_custom_call.1} parent=11 // pred_region
          _
        $region24: #{tpu_custom_call.1} parent=11 // pred_fallthru
          _
        // Predicated region
        $region25: #{tpu_custom_call.1} parent=11 // pred_check
          %p199 = pneg %p128
        $region26: #{tpu_custom_call.1} parent=11 // pred_check_branch
          %201 = sbr.rel (%p199) target = $region28
        $region27: #{tpu_custom_call.1} parent=11 // pred_region
          _
        $region28: #{tpu_custom_call.1} parent=11 // pred_fallthru
          _
        // Predicated region
        $region29: #{tpu_custom_call.1} parent=11 // pred_check
          %p202 = pneg %p149
        $region30: #{tpu_custom_call.1} parent=11 // pred_check_branch
          %204 = sbr.rel (%p202) target = $region32
        $region31: #{tpu_custom_call.1} parent=11 // pred_region
          _
        $region32: #{tpu_custom_call.1} parent=11 // pred_fallthru
          _
      $region12: #{tpu_custom_call.1} parent=5 // pred_fallthru
        _
      %p205 = scmp.lt.s32.totalorder %s18, 2
      // Predicated region
      $region33: #{tpu_custom_call.1} parent=5 // pred_check
        %p206 = pneg %p205
      $region34: #{tpu_custom_call.1} parent=5 // pred_check_branch
        %208 = sbr.rel (%p206) target = $region36
      $region35: #{tpu_custom_call.1} parent=5 // pred_region
        // Predicated region
        $region37: #{tpu_custom_call.1} parent=35 // pred_check
          %p209 = pneg %p38
        $region38: #{tpu_custom_call.1} parent=35 // pred_check_branch
          %211 = sbr.rel (%p209) target = $region40
        $region39: #{tpu_custom_call.1} parent=35 // pred_region
          %s212 = sand.u32 %s28, 1
          %s213 = scalar_lea.sflag [#allocation3], %s212
          %s214 = sand.u32 %s28, 1
          %s215 = smul.addr %s214, 8
          %s216 = scalar_lea.vmem [#allocation2], %s215
          %s218 = ssub.s32 128, 128
          %219 = vsyncadd %s213, %s218
          %s220 = smul.addr %s18, 2
          %s221 = smul.addr %s220, 64
          %s222 = scalar_lea.hbm %s0, %s221
          %s224 = sshll.u32 %s216, 4
          %s225 = int_to_ptr.vmem [resolvable:$true] %s224
          %227 = dma.hbm_to_vmem [thread:$0]  %s222, 128, %s225, %s213
        $region40: #{tpu_custom_call.1} parent=35 // pred_fallthru
          _
      $region36: #{tpu_custom_call.1} parent=5 // pred_fallthru
        _
      %p228 = scmp.le.s32.totalorder 1, %s18
      %p229 = scmp.lt.s32.totalorder %s18, 3
      %p230 = pnand %p228, %p229
      %p231 = pneg %p230
      // Predicated region
      $region41: #{tpu_custom_call.1} parent=5 // pred_check
        _
      $region42: #{tpu_custom_call.1} parent=5 // pred_check_branch
        %233 = sbr.rel (%p230) target = $region44
      $region43: #{tpu_custom_call.1} parent=5 // pred_region
        %s234 = ssub.s32 %s18, 1
        %s235 = sand.u32 %s31, 1
        %s236 = scalar_lea.sflag [#allocation3], %s235
        %s237 = sand.u32 %s31, 1
        %s238 = smul.addr %s237, 8
        %s239 = scalar_lea.vmem [#allocation2], %s238
        // Predicated region
        $region45: #{tpu_custom_call.1} parent=43 // pred_check
          %p240 = pneg %p44
        $region46: #{tpu_custom_call.1} parent=43 // pred_check_branch
          %242 = sbr.rel (%p240) target = $region48
        $region47: #{tpu_custom_call.1} parent=43 // pred_region
          %243 = dma.done %s236, 128
        $region48: #{tpu_custom_call.1} parent=43 // pred_fallthru
          _
        %s244 = sand.u32 %s31, 1
        %s245 = scalar_lea.sflag [#allocation3], %s244
        %s246 = sand.u32 %s31, 1
        %s247 = smul.addr %s246, 8
        %s248 = scalar_lea.vmem [#allocation2], %s247
        %p249 = pneg %p44
        %p250 = pneg %p41
        %p251 = pneg %p65
        %p252 = pneg %p62
        %p253 = pneg %p86
        %p254 = pneg %p83
        %p255 = pneg %p107
        %p256 = pneg %p104
        %p257 = pneg %p128
        %p258 = pneg %p125
        %p259 = pneg %p149
        %p260 = pneg %p146
        %p261 = pneg %p175
        %p262 = pneg %p172
        %s263 = sand.u32 %s162, 1
        %s264 = scalar_lea.sflag [#allocation4], %s263
        %s265 = sand.u32 %s162, 1
        %s266 = smul.addr %s265, 64
        %s267 = scalar_lea.vmem [#allocation5], %s266
        %v268 = vld [vmem:[%s239] sm:$0xff]
        %v269 = vld [vmem:[%s1] sm:$0xff]
        %v270 = vld [vmem:[%s2] sm:$0xff]
        %272 = vset.pattern.permute.xlu0 0
        %273 = vperm.xlu0 %272, %v270
        %v274 = vpop.permute.xlu0 %273
        %v277 = vcombine.high %v268, %v268
        %vm278 = vcmask 31744
        %v280 = vsel %vm278, %v269, 0
        %vm282 = vcmask 1043456
        %v283 = vsel %vm282, %v268, 0
        %v285 = vsel %vm282, %v277, 0
        %287 = vmatprep.subr.mxu0 %v285
        %288 = vmatpush1.msra.mxu0 %v283
        %289 = vmatprep.subr.mxu0 0.0
        %290 = vmatpush1.msra.mxu0 0.0
        %291 = vmatprep.subr.mxu0 0.0
        %292 = vmatpush1.msra.mxu0 0.0
        %293 = vmatprep.subr.mxu0 0.0
        %294 = vmatpush1.msra.mxu0 0.0
        %295 = vmatprep.subr.mxu0 0.0
        %296 = vmatpush1.msra.mxu0 0.0
        %297 = vmatprep.subr.mxu0 0.0
        %298 = vmatpush1.msra.mxu0 0.0
        %299 = vmatprep.subr.mxu0 0.0
        %300 = vmatpush1.msra.mxu0 0.0
        %301 = vmatprep.subr.mxu0 0.0
        %302 = vmatpush1.msra.mxu0 0.0
        %303 = vmatprep.subr.mxu0 0.0
        %304 = vmatpush1.msra.mxu0 0.0
        %305 = vmatprep.subr.mxu0 0.0
        %306 = vmatpush1.msra.mxu0 0.0
        %307 = vmatprep.subr.mxu0 0.0
        %308 = vmatpush1.msra.mxu0 0.0
        %309 = vmatprep.subr.mxu0 0.0
        %310 = vmatpush1.msra.mxu0 0.0
        %311 = vmatprep.subr.mxu0 0.0
        %312 = vmatpush1.msra.mxu0 0.0
        %313 = vmatprep.subr.mxu0 0.0
        %314 = vmatpush1.msra.mxu0 0.0
        %315 = vmatprep.subr.mxu0 0.0
        %316 = vmatpush1.msra.mxu0 0.0
        %317 = vmatprep.subr.mxu0 0.0
        %318 = vmatpush1.msra.mxu0 0.0
        %319 = vmatprep.subr.mxu0 0.0
        %320 = vmatpush1.msra.mxu0 0.0
        %321 = vmatprep.subr.mxu0 0.0
        %322 = vmatpush1.msra.mxu0 0.0
        %323 = vmatprep.subr.mxu0 0.0
        %324 = vmatpush1.msra.mxu0 0.0
        %325 = vmatprep.subr.mxu0 0.0
        %326 = vmatpush1.msra.mxu0 0.0
        %327 = vmatprep.subr.mxu0 0.0
        %328 = vmatpush1.msra.mxu0 0.0
        %329 = vmatprep.subr.mxu0 0.0
        %330 = vmatpush1.msra.mxu0 0.0
        %331 = vmatprep.subr.mxu0 0.0
        %332 = vmatpush1.msra.mxu0 0.0
        %333 = vmatprep.subr.mxu0 0.0
        %334 = vmatpush1.msra.mxu0 0.0
        %335 = vmatprep.subr.mxu0 0.0
        %336 = vmatpush1.msra.mxu0 0.0
        %337 = vmatprep.subr.mxu0 0.0
        %338 = vmatpush1.msra.mxu0 0.0
        %339 = vmatprep.subr.mxu0 0.0
        %340 = vmatpush1.msra.mxu0 0.0
        %341 = vmatprep.subr.mxu0 0.0
        %342 = vmatpush1.msra.mxu0 0.0
        %343 = vmatprep.subr.mxu0 0.0
        %344 = vmatpush1.msra.mxu0 0.0
        %345 = vmatprep.subr.mxu0 0.0
        %346 = vmatpush1.msra.mxu0 0.0
        %347 = vmatprep.subr.mxu0 0.0
        %348 = vmatpush1.msra.mxu0 0.0
        %349 = vmatprep.subr.mxu0 0.0
        %350 = vmatpush1.msra.mxu0 0.0
        %351 = vmatprep.mubr.f32.mxu0 0.0
        %352 = vmatmul.mubr.f32.gmra.mrb[0].mxu0 %v280
        %v353 = vpop.f32.mrb[0].mxu0
        %v354 = vadd.f32 %v274, %v353
        %v355 = vpop.f32.mrb[0].mxu0
        %v356 = vadd.f32 %v274, %v355
        %357 = vdwg.mxu0
        %v358 = vmax.f32 %v354, 0.0
        %v359 = vmax.f32 %v356, 0.0
        %v360 = vld [vmem:[%s5] sm:$0xff]
        %v361 = vld [vmem:[%s5 + $0x8] sm:$0xff]
        %v362 = vld [vmem:[%s5 + $0x10] sm:$0x1]
        %v363 = vld [vmem:[%s5 + $0x18] sm:$0x1]
        %366 = vrot.lane.b32.xlu0 %v358, 17
        %v367 = vpop.permute.xlu0 %366
        %368 = vrot.lane.b32.xlu0 %v359, 17
        %v369 = vpop.permute.xlu0 %368
        %vm370 = vcmask 138240
        %v371 = vsel %vm370, %v367, %v369
        %v374 = vsel %vm370, 0.0, %v367
        %v375 = vlaneseq
        %v376 = vshrl.u32 %v375, 7
        %v377 = vsub.s32 0, %v376
        %v378 = vrot.slane %v360, %v377
        %v379 = vlaneseq
        %v380 = vshrl.u32 %v379, 7
        %v381 = vsub.s32 0, %v380
        %v382 = vrot.slane %v361, %v381
        %v383 = vmul.f32 %v374, %v378
        %v384 = vmul.f32 %v371, %v382
        %385 = vrot.lane.b32.xlu0 %v358, 16
        %v386 = vpop.permute.xlu0 %385
        %387 = vrot.lane.b32.xlu0 %v359, 16
        %v388 = vpop.permute.xlu0 %387
        %vm389 = vcmask 130048
        %v390 = vsel %vm389, %v386, %v388
        %v393 = vsel %vm389, 0.0, %v386
        %v394 = vlaneseq
        %v395 = vshrl.u32 %v394, 7
        %v396 = vsub.s32 1, %v395
        %v397 = vrot.slane %v360, %v396
        %v398 = vlaneseq
        %v399 = vshrl.u32 %v398, 7
        %v400 = vsub.s32 1, %v399
        %v401 = vrot.slane %v361, %v400
        %v402 = vmul.f32 %v393, %v397
        %v403 = vmul.f32 %v390, %v401
        %404 = vrot.lane.b32.xlu0 %v358, 15
        %v405 = vpop.permute.xlu0 %404
        %406 = vrot.lane.b32.xlu0 %v359, 15
        %v407 = vpop.permute.xlu0 %406
        %vm408 = vcmask 121856
        %v409 = vsel %vm408, %v405, %v407
        %v412 = vsel %vm408, 0.0, %v405
        %v413 = vlaneseq
        %v414 = vshrl.u32 %v413, 7
        %v415 = vsub.s32 2, %v414
        %v416 = vrot.slane %v360, %v415
        %v417 = vlaneseq
        %v418 = vshrl.u32 %v417, 7
        %v419 = vsub.s32 2, %v418
        %v420 = vrot.slane %v361, %v419
        %v421 = vmul.f32 %v412, %v416
        %v422 = vmul.f32 %v409, %v420
        %423 = vrot.lane.b32.xlu0 %v358, 1
        %v424 = vpop.permute.xlu0 %423
        %425 = vrot.lane.b32.xlu0 %v359, 1
        %v426 = vpop.permute.xlu0 %425
        %vm427 = vcmask 7168
        %v428 = vsel %vm427, %v424, %v426
        %v431 = vsel %vm427, 0.0, %v424
        %v432 = vlaneseq
        %v433 = vshrl.u32 %v432, 7
        %v434 = vsub.s32 3, %v433
        %v435 = vrot.slane %v360, %v434
        %v436 = vlaneseq
        %v437 = vshrl.u32 %v436, 7
        %v438 = vsub.s32 3, %v437
        %v439 = vrot.slane %v361, %v438
        %v440 = vmul.f32 %v431, %v435
        %v441 = vmul.f32 %v428, %v439
        %v442 = vlaneseq
        %v443 = vshrl.u32 %v442, 7
        %v444 = vsub.s32 4, %v443
        %v445 = vrot.slane %v360, %v444
        %v446 = vlaneseq
        %v447 = vshrl.u32 %v446, 7
        %v448 = vsub.s32 4, %v447
        %v449 = vrot.slane %v361, %v448
        %v450 = vmul.f32 %v358, %v445
        %v451 = vmul.f32 %v359, %v449
        %452 = vrot.lane.b32.xlu0 %v358, 127
        %v453 = vpop.permute.xlu0 %452
        %454 = vrot.lane.b32.xlu0 %v359, 127
        %v455 = vpop.permute.xlu0 %454
        %vm456 = vcmask 1039360
        %v457 = vsel %vm456, %v453, %v455
        %v460 = vsel %vm456, %v455, 0.0
        %v461 = vlaneseq
        %v462 = vshrl.u32 %v461, 7
        %v463 = vsub.s32 5, %v462
        %v464 = vrot.slane %v360, %v463
        %v465 = vlaneseq
        %v466 = vshrl.u32 %v465, 7
        %v467 = vsub.s32 5, %v466
        %v468 = vrot.slane %v361, %v467
        %v469 = vmul.f32 %v457, %v464
        %v470 = vmul.f32 %v460, %v468
        %471 = vrot.lane.b32.xlu0 %v358, 113
        %v472 = vpop.permute.xlu0 %471
        %473 = vrot.lane.b32.xlu0 %v359, 113
        %v474 = vpop.permute.xlu0 %473
        %vm475 = vcmask 924672
        %v476 = vsel %vm475, %v472, %v474
        %v479 = vsel %vm475, %v474, 0.0
        %v480 = vlaneseq
        %v481 = vshrl.u32 %v480, 7
        %v482 = vsub.s32 6, %v481
        %v483 = vrot.slane %v360, %v482
        %v484 = vlaneseq
        %v485 = vshrl.u32 %v484, 7
        %v486 = vsub.s32 6, %v485
        %v487 = vrot.slane %v361, %v486
        %v488 = vmul.f32 %v476, %v483
        %v489 = vmul.f32 %v479, %v487
        %490 = vrot.lane.b32.xlu0 %v358, 112
        %v491 = vpop.permute.xlu0 %490
        %492 = vrot.lane.b32.xlu0 %v359, 112
        %v493 = vpop.permute.xlu0 %492
        %vm494 = vcmask 916480
        %v495 = vsel %vm494, %v491, %v493
        %v498 = vsel %vm494, %v493, 0.0
        %v499 = vlaneseq
        %v500 = vshrl.u32 %v499, 7
        %v501 = vsub.s32 7, %v500
        %v502 = vrot.slane %v360, %v501
        %v503 = vlaneseq
        %v504 = vshrl.u32 %v503, 7
        %v505 = vsub.s32 7, %v504
        %v506 = vrot.slane %v361, %v505
        %v507 = vmul.f32 %v495, %v502
        %v508 = vmul.f32 %v498, %v506
        %509 = vrot.lane.b32.xlu0 %v358, 111
        %v510 = vpop.permute.xlu0 %509
        %511 = vrot.lane.b32.xlu0 %v359, 111
        %v512 = vpop.permute.xlu0 %511
        %vm513 = vcmask 908288
        %v514 = vsel %vm513, %v510, %v512
        %v517 = vsel %vm513, %v512, 0.0
        %v518 = vlaneseq
        %v519 = vshrl.u32 %v518, 7
        %v520 = vsub.s32 0, %v519
        %v521 = vrot.slane %v362, %v520
        %v522 = vlaneseq
        %v523 = vshrl.u32 %v522, 7
        %v524 = vsub.s32 0, %v523
        %v525 = vrot.slane %v363, %v524
        %v526 = vmul.f32 %v514, %v521
        %v527 = vmul.f32 %v517, %v525
        %v528 = vld [vmem:[%s3] sm:$0xff]
        %v529 = vld [vmem:[%s3 + $0x8] sm:$0xff]
        %v530 = vld [vmem:[%s3 + $0x10] sm:$0xff]
        %v531 = vld [vmem:[%s3 + $0x18] sm:$0xff]
        %v532 = vld [vmem:[%s4] sm:$0xff]
        %v533 = vld [vmem:[%s4 + $0x8] sm:$0xff]
        %v534 = vld [vmem:[%s4 + $0x10] sm:$0xff]
        %v535 = vld [vmem:[%s4 + $0x18] sm:$0xff]
        %537 = vset.pattern.permute.xlu0 0
        %538 = vperm.xlu0 %537, %v532
        %v539 = vpop.permute.xlu0 %538
        %542 = vset.pattern.permute.xlu0 0
        %543 = vperm.xlu0 %542, %v533
        %v544 = vpop.permute.xlu0 %543
        %547 = vset.pattern.permute.xlu0 0
        %548 = vperm.xlu0 %547, %v534
        %v549 = vpop.permute.xlu0 %548
        %552 = vset.pattern.permute.xlu0 0
        %553 = vperm.xlu0 %552, %v535
        %v554 = vpop.permute.xlu0 %553
        %vm556 = vcmask 588800
        %v558 = vsel %vm556, %v528, 0
        %v561 = vsel %vm556, %v529, 0
        %v564 = vsel %vm556, %v530, 0
        %v567 = vsel %vm556, %v531, 0
        %569 = vmatprep.subr.mxu0 %v384
        %570 = vmatpush1.msra.mxu0 %v383
        %571 = vmatprep.subr.mxu0 %v403
        %572 = vmatpush1.msra.mxu0 %v402
        %573 = vmatprep.subr.mxu0 %v422
        %574 = vmatpush1.msra.mxu0 %v421
        %575 = vmatprep.subr.mxu0 %v441
        %576 = vmatpush1.msra.mxu0 %v440
        %577 = vmatprep.subr.mxu0 %v451
        %578 = vmatpush1.msra.mxu0 %v450
        %579 = vmatprep.subr.mxu0 %v470
        %580 = vmatpush1.msra.mxu0 %v469
        %581 = vmatprep.subr.mxu0 %v489
        %582 = vmatpush1.msra.mxu0 %v488
        %583 = vmatprep.subr.mxu0 %v508
        %584 = vmatpush1.msra.mxu0 %v507
        %585 = vmatprep.subr.mxu0 %v527
        %586 = vmatpush1.msra.mxu0 %v526
        %587 = vmatprep.subr.mxu0 0.0
        %588 = vmatpush1.msra.mxu0 0.0
        %589 = vmatprep.subr.mxu0 0.0
        %590 = vmatpush1.msra.mxu0 0.0
        %591 = vmatprep.subr.mxu0 0.0
        %592 = vmatpush1.msra.mxu0 0.0
        %593 = vmatprep.subr.mxu0 0.0
        %594 = vmatpush1.msra.mxu0 0.0
        %595 = vmatprep.subr.mxu0 0.0
        %596 = vmatpush1.msra.mxu0 0.0
        %597 = vmatprep.subr.mxu0 0.0
        %598 = vmatpush1.msra.mxu0 0.0
        %599 = vmatprep.subr.mxu0 0.0
        %600 = vmatpush1.msra.mxu0 0.0
        %601 = vmatprep.subr.mxu0 0.0
        %602 = vmatpush1.msra.mxu0 0.0
        %603 = vmatprep.subr.mxu0 0.0
        %604 = vmatpush1.msra.mxu0 0.0
        %605 = vmatprep.subr.mxu0 0.0
        %606 = vmatpush1.msra.mxu0 0.0
        %607 = vmatprep.subr.mxu0 0.0
        %608 = vmatpush1.msra.mxu0 0.0
        %609 = vmatprep.subr.mxu0 0.0
        %610 = vmatpush1.msra.mxu0 0.0
        %611 = vmatprep.subr.mxu0 0.0
        %612 = vmatpush1.msra.mxu0 0.0
        %613 = vmatprep.subr.mxu0 0.0
        %614 = vmatpush1.msra.mxu0 0.0
        %615 = vmatprep.subr.mxu0 0.0
        %616 = vmatpush1.msra.mxu0 0.0
        %617 = vmatprep.subr.mxu0 0.0
        %618 = vmatpush1.msra.mxu0 0.0
        %619 = vmatprep.subr.mxu0 0.0
        %620 = vmatpush1.msra.mxu0 0.0
        %621 = vmatprep.subr.mxu0 0.0
        %622 = vmatpush1.msra.mxu0 0.0
        %623 = vmatprep.subr.mxu0 0.0
        %624 = vmatpush1.msra.mxu0 0.0
        %625 = vmatprep.subr.mxu0 0.0
        %626 = vmatpush1.msra.mxu0 0.0
        %627 = vmatprep.subr.mxu0 0.0
        %628 = vmatpush1.msra.mxu0 0.0
        %629 = vmatprep.subr.mxu0 0.0
        %630 = vmatpush1.msra.mxu0 0.0
        %631 = vmatprep.subr.mxu0 0.0
        %632 = vmatpush1.msra.mxu0 0.0
        %633 = vmatprep.mubr.f32.mxu0 0.0
        %634 = vmatmul.mubr.f32.gmra.mrb[0].mxu0 %v558
        %v635 = vpop.f32.mrb[0].mxu0
        %v636 = vadd.f32 %v539, %v635
        %v637 = vpop.f32.mrb[0].mxu0
        %v638 = vadd.f32 %v539, %v637
        %639 = vmatprep.mubr.f32.mxu0 0.0
        %640 = vmatmul.mubr.f32.gmra.mrb[0].mxu0 %v561
        %v641 = vpop.f32.mrb[0].mxu0
        %v642 = vadd.f32 %v544, %v641
        %v643 = vpop.f32.mrb[0].mxu0
        %v644 = vadd.f32 %v544, %v643
        %645 = vmatprep.mubr.f32.mxu0 0.0
        %646 = vmatmul.mubr.f32.gmra.mrb[0].mxu0 %v564
        %v647 = vpop.f32.mrb[0].mxu0
        %v648 = vadd.f32 %v549, %v647
        %v649 = vpop.f32.mrb[0].mxu0
        %v650 = vadd.f32 %v549, %v649
        %651 = vmatprep.mubr.f32.mxu0 0.0
        %652 = vmatmul.mubr.f32.gmra.mrb[0].mxu0 %v567
        %v653 = vpop.f32.mrb[0].mxu0
        %v654 = vadd.f32 %v554, %v653
        %v655 = vpop.f32.mrb[0].mxu0
        %v656 = vadd.f32 %v554, %v655
        %657 = vdwg.mxu0
        %v658 = vmax.f32 %v636, 0.0
        %v659 = vmax.f32 %v638, 0.0
        %v660 = vmax.f32 %v642, 0.0
        %v661 = vmax.f32 %v644, 0.0
        %v662 = vmax.f32 %v648, 0.0
        %v663 = vmax.f32 %v650, 0.0
        %v664 = vmax.f32 %v654, 0.0
        %v665 = vmax.f32 %v656, 0.0
        %666 = vst [vmem:[%s267] sm:$0xff] %v658
        %667 = vst [vmem:[%s267 + $0x8] sm:$0xff] %v659
        %668 = vst [vmem:[%s267 + $0x10] sm:$0xff] %v660
        %669 = vst [vmem:[%s267 + $0x18] sm:$0xff] %v661
        %670 = vst [vmem:[%s267 + $0x20] sm:$0xff] %v662
        %671 = vst [vmem:[%s267 + $0x28] sm:$0xff] %v663
        %672 = vst [vmem:[%s267 + $0x30] sm:$0xff] %v664
        %673 = vst [vmem:[%s267 + $0x38] sm:$0xff] %v665
        %s674 = sand.u32 %s162, 1
        %s675 = scalar_lea.sflag [#allocation4], %s674
        %s676 = sand.u32 %s162, 1
        %s677 = smul.addr %s676, 64
        %s678 = scalar_lea.vmem [#allocation5], %s677
        // Predicated region
        $region49: #{tpu_custom_call.1} parent=43 // pred_check
          %p679 = pneg %p172
        $region50: #{tpu_custom_call.1} parent=43 // pred_check_branch
          %681 = sbr.rel (%p679) target = $region52
        $region51: #{tpu_custom_call.1} parent=43 // pred_region
          %s683 = ssub.s32 1024, 1024
          %684 = vsyncadd %s675, %s683
          %s685 = smul.addr %s23, 8
          %s686 = smul.addr %s685, 128
          %s687 = scalar_lea.hbm %s6, %s686
          %s688 = sshll.u32 %s678, 4
          %s689 = int_to_ptr.vmem [resolvable:$true] %s688
          %694 = dma.vmem_to_hbm [thread:$0]  %s689, 1024, %s687, %s675, 256, 256, 16
        $region52: #{tpu_custom_call.1} parent=43 // pred_fallthru
          _
      $region44: #{tpu_custom_call.1} parent=5 // pred_fallthru
        _
      %p695 = scmp.le.s32.totalorder 2, %s18
      // Predicated region
      $region53: #{tpu_custom_call.1} parent=5 // pred_check
        %p696 = pneg %p695
      $region54: #{tpu_custom_call.1} parent=5 // pred_check_branch
        %698 = sbr.rel (%p696) target = $region56
      $region55: #{tpu_custom_call.1} parent=5 // pred_region
        %s699 = ssub.s32 %s18, 2
        // Predicated region
        $region57: #{tpu_custom_call.1} parent=55 // pred_check
          %p700 = pneg %p178
        $region58: #{tpu_custom_call.1} parent=55 // pred_check_branch
          %702 = sbr.rel (%p700) target = $region60
        $region59: #{tpu_custom_call.1} parent=55 // pred_region
          %s703 = sand.u32 %s163, 1
          %s704 = scalar_lea.sflag [#allocation4], %s703
          %s705 = sand.u32 %s163, 1
          %s706 = smul.addr %s705, 64
          %s707 = scalar_lea.vmem [#allocation5], %s706
          %708 = dma.done %s704, 1024
        $region60: #{tpu_custom_call.1} parent=55 // pred_fallthru
          _
      $region56: #{tpu_custom_call.1} parent=5 // pred_fallthru
        _
    $region6: #{tpu_custom_call.1} parent=1 // loop_footer
      %s22 = sadd.s32 1, %s18
    $region7: #{tpu_custom_call.1} parent=1 // loop_footer_branch
      %17 = sbr.rel target = $region3
    $region8: #{tpu_custom_call.1} parent=1 // loop_exit
      _
    %709 = vsyncpa [#allocation3], 1
    %s710 = scalar_lea.sflag [#allocation3], 1
    %711 = vsyncpa %s710, 1
    %712 = vsyncpa [#allocation4], 1
    %s713 = scalar_lea.sflag [#allocation4], 1
    %714 = vsyncpa %s713, 1

</llo_original>
